<compile_context>
chip_gen: v7x
topology: tpu7x:2x2x1
jax: 0.10.0
libtpu: 0.0.40
codegen_flags: <defaults>
</compile_context>

<pallas_src>
import functools

import jax
import jax.numpy as jnp
import numpy as np
from jax.experimental import pallas as pl
from jax.experimental.pallas import tpu as pltpu


# --------------------------------------------------------------------------------------
# Kernels
# --------------------------------------------------------------------------------------
def _lane_replicate(x, rep):
    """Replicate `x` `rep`x along the last (lane) axis.

    Implemented with log2(rep) minor-axis concatenations instead of jnp.tile:
    concatenation along the minor dim (including non-128-aligned operand widths) is the
    well-trodden Mosaic path, whereas jnp.tile's broadcast+reshape lowering would need a
    non-lane-aligned reshape.  Either way the replication lands on the copy/XLU path,
    not on the (binding) store slot.
    """
    if rep == 1:
        return x
    pieces = []
    block = x
    r = rep
    while r:
        if r & 1:
            pieces.append(block)
        r >>= 1
        if r:
            block = jnp.concatenate([block, block], axis=-1)
    return pieces[0] if len(pieces) == 1 else jnp.concatenate(pieces, axis=-1)


def _pos_enc_add_kernel(f1_ref, f2_ref, o_ref, *, rep):
    """o[h, w*D + d] = f1[h, d] + f2[w*D + d] for one (tile_h, tile_w*D) output tile.

    f1_ref: (tile_h, D)        host-precomputed row term (replicated over `rep` w-columns)
    f2_ref: (1, tile_w*D)      host-precomputed column term (sublane-broadcast)
    o_ref : (tile_h, tile_w*D) lane-dense output slab tile
    No transcendentals, no selects: one lane replication + one vadd per output vreg.
    """
    o_ref[...] = _lane_replicate(f1_ref[...], rep) + f2_ref[...]


def _pos_enc_pretiled_kernel(f1_ref, f2_ref, o_ref):
    """Fallback body: f1 already lane-tiled on the host; pure element-wise add."""
    o_ref[...] = f1_ref[...] + f2_ref[...]


# --------------------------------------------------------------------------------------
# Tiling policy
# --------------------------------------------------------------------------------------
def _pick_tiles(height, width, hidden_dim, target_bytes, cap_bytes):
    """Pick (tile_h, tile_w) for the (H, W*D) output slab.

    Mosaic block rules:
      * tile_h divides H and is a multiple of 8 (or == H),
      * tile_w divides W and tile_w*D is a multiple of 128 (or tile_w == W).
    Policy:
      * keep lane tiles as wide as the byte cap allows (lane-dense stores),
      * grow row tiles up to target_bytes (amortize the ~0.35 us per-step overhead),
      * but leave >= 2 row steps when H >= 16 so the "parallel" row axis can shard
        across the two v7x TensorCores (harmless single extra step on v5e/v6e).
    """
    elem = 4  # float32
    th_cands = [d for d in range(1, height + 1)
                if height % d == 0 and (d % 8 == 0 or d == height)]
    tw_cands = [d for d in range(1, width + 1)
                if width % d == 0 and ((d * hidden_dim) % 128 == 0 or d == width)]

    def nbytes(th, tw):
        return th * tw * hidden_dim * elem

    th_min = min(th_cands)
    tw_fit = [tw for tw in tw_cands if nbytes(th_min, tw) <= cap_bytes]
    tw = max(tw_fit) if tw_fit else min(tw_cands)

    def pick_th(cands):
        under_target = [th for th in cands if nbytes(th, tw) <= target_bytes]
        if under_target:
            return max(under_target)
        under_cap = [th for th in cands if nbytes(th, tw) <= cap_bytes]
        if under_cap:
            return min(under_cap)
        return min(cands)

    th = pick_th(th_cands)
    if height >= 16 and height // th < 2:
        split = [d for d in th_cands if height // d >= 2]
        if split:
            th = pick_th(split)
    return th, tw


def _vmem_capacity_bytes():
    try:
        return int(pltpu.get_tpu_info().vmem_capacity_bytes)
    except Exception:
        return 64 * 1024 * 1024  # conservative: v7x per-TensorCore VMEM


# --------------------------------------------------------------------------------------
# Module
# --------------------------------------------------------------------------------------
class PositionalEncoding2D:
    """JAX/Pallas port of the PyTorch PositionalEncoding2D module."""

    def __init__(self, height: int, width: int, hidden_dim: int):
        assert hidden_dim % 2 == 0, "Hidden dim should be even."
        self.height = height
        self.width = width
        self.hidden_dim = hidden_dim

        # ---- host precompute (float64 -> f32) of the two separable tables --------------
        # Exactly the PyTorch formula: for group i = d % 4,
        #   wk = 1 / 2**(2*k / d_i) over the global indices k[i::4], d_i = len(k[i::4]);
        #   f1 uses sin/cos by (i % 2) on h, f2 uses sin/cos by (i // 2) on w.
        k = np.arange(hidden_dim)
        h_idx = np.arange(height, dtype=np.float64)
        w_idx = np.arange(width, dtype=np.float64)
        f1 = np.zeros((height, hidden_dim), dtype=np.float64)  # (h, d) row term
        f2 = np.zeros((width, hidden_dim), dtype=np.float64)   # (w, d) column term
        fns = [np.sin, np.cos]
        for i in range(4):
            ks = k[i::4]
            if ks.shape[0] == 0:
                continue
            wk = 1.0 / (2.0 ** (2.0 * ks / ks.shape[0]))
            f1[:, i::4] = fns[i % 2](h_idx[:, None] * wk[None, :])
            f2[:, i::4] = fns[i // 2](w_idx[:, None] * wk[None, :])

        lanes = width * hidden_dim                       # lane index l = w*D + d
        f1_hd = f1.astype(np.float32)                    # (H, D)
        f2_row = f2.reshape(1, lanes).astype(np.float32) # (1, W*D)

        # ---- per-generation tile sizing -------------------------------------------------
        vmem_bytes = _vmem_capacity_bytes()
        cap_bytes = min(8 << 20, vmem_bytes // 16)       # 8 MiB on v5e/v6e, 4 MiB on v7x
        target_bytes = cap_bytes // 2
        vmem_limit = max(32 << 20, min(vmem_bytes // 2, 64 << 20))

        th, tw = _pick_tiles(height, width, hidden_dim, target_bytes, cap_bytes)
        tl = tw * hidden_dim
        grid = (height // th, lanes // tl)

        out_shape = jax.ShapeDtypeStruct((height, lanes), jnp.float32)
        out_spec = pl.BlockSpec((th, tl), lambda i, j: (i, j))
        f2_spec = pl.BlockSpec((1, tl), lambda i, j: (0, j))
        cparams = pltpu.CompilerParams(
            dimension_semantics=("parallel", "parallel"),
            vmem_limit_bytes=vmem_limit,
        )

        try:
            # Primary: stream the small (H, D) f1 table and lane-replicate it in-kernel.
            # HBM traffic ~= writes only (reads are H*D + W*D, negligible).
            pos_hw = pl.pallas_call(
                functools.partial(_pos_enc_add_kernel, rep=tw),
                grid=grid,
                in_specs=[
                    pl.BlockSpec((th, hidden_dim), lambda i, j: (i, 0)),
                    f2_spec,
                ],
                out_specs=out_spec,
                out_shape=out_shape,
                compiler_params=cparams,
            )(jnp.asarray(f1_hd), jnp.asarray(f2_row))
            pos_hw = jax.block_until_ready(pos_hw)
        except Exception:
            # Fallback (guaranteed lowering): host-pretiled f1 slab + pure element-wise add.
            # Costs one extra streamed read the size of the output; still store/HBM-bound.
            f1_tiled = np.tile(f1_hd, (1, width))        # (H, W*D), out[h, w*D+d] = f1[h, d]
            pos_hw = pl.pallas_call(
                _pos_enc_pretiled_kernel,
                grid=grid,
                in_specs=[
                    pl.BlockSpec((th, tl), lambda i, j: (i, j)),
                    f2_spec,
                ],
                out_specs=out_spec,
                out_shape=out_shape,
                compiler_params=cparams,
            )(jnp.asarray(f1_tiled), jnp.asarray(f2_row))
            pos_hw = jax.block_until_ready(pos_hw)

        self.pos = pos_hw.reshape(height, width, hidden_dim)

    def __call__(self, t: jax.Array) -> jax.Array:
        # PyTorch: return self.pos[None, :, :, :, None, None].to(t.device)
        # `t` is only used for device placement (arrays already live on the default TPU
        # device); the table stays float32, matching the PyTorch module.
        del t
        return self.pos[None, :, :, :, None, None]


# --------------------------------------------------------------------------------------
# Verification (pure-numpy transcription of the given PyTorch __init__, line by line:
# meshgrid 'ij', global k[i::4] indices, per-group d, base-2 frequencies).
# --------------------------------------------------------------------------------------
def _reference_pos(height: int, width: int, hidden_dim: int) -> np.ndarray:
    t_h, t_w = np.meshgrid(np.arange(height), np.arange(width), indexing="ij")
    t_h = t_h.reshape(-1).astype(np.float64)
    t_w = t_w.reshape(-1).astype(np.float64)
    k = np.arange(hidden_dim)
    pos = np.zeros((height * width, hidden_dim), dtype=np.float64)
    fns = [np.sin, np.cos]
    for i in range(4):
        ks = k[i::4]
        if ks.shape[0] == 0:
            continue
        d = ks.shape[0]
        wk = 1.0 / (2.0 ** (2.0 * ks / d))
        pos[:, i::4] = fns[i % 2](t_h[:, None] * wk) + fns[i // 2](t_w[:, None] * wk)
    return pos.reshape(height, width, hidden_dim).astype(np.float32)


if __name__ == "__main__":
    H, W, HIDDEN = 16, 16, 32
    key = jax.random.PRNGKey(0)
    # `t` in the original module is an NCHW feature map used only for device placement.
    t = jax.random.normal(key, (2, HIDDEN, H, W), dtype=jnp.float32)

    module = PositionalEncoding2D(H, W, HIDDEN)
    out = jax.block_until_ready(module(t))

    assert out.shape == (1, H, W, HIDDEN, 1, 1), out.shape
    assert out.dtype == jnp.float32

    ref = _reference_pos(H, W, HIDDEN)[None, :, :, :, None, None]
    np.testing.assert_allclose(np.asarray(out), ref, rtol=1e-5, atol=1e-5)

    print("KERNEL_OK")
</pallas_src>

<mosaic_0001>
module attributes {stable_mosaic.version = 11 : i64} {
  func.func @_pos_enc_add_kernel(%arg0: i32, %arg1: i32, %arg2: memref<8x32xf32, #tpu.memory_space<vmem>>, %arg3: memref<1x512xf32, #tpu.memory_space<vmem>>, %arg4: memref<8x512xf32, #tpu.memory_space<vmem>>) attributes {dimension_semantics = [#tpu.dimension_semantics<parallel>, #tpu.dimension_semantics<parallel>], iteration_bounds = array<i64: 2, 1>, scalar_prefetch = 0 : i64, scratch_operands = 0 : i64, tpu.core_type = #tpu.core_type<tc>, window_params = [{transform_indices = @transform_0, window_bounds = array<i64: 8, 32>}, {transform_indices = @transform_1, window_bounds = array<i64: 1, 512>}, {transform_indices = @transform_2, window_bounds = array<i64: 8, 512>}]} {
    %c0 = arith.constant 0 : index
    %c0_0 = arith.constant 0 : index
    %0 = vector.load %arg2[%c0, %c0_0] : memref<8x32xf32, #tpu.memory_space<vmem>>, vector<8x32xf32>
    %1 = tpu.concatenate %0, %0 in 1 : vector<8x32xf32>, vector<8x32xf32> -> vector<8x64xf32>
    %2 = tpu.concatenate %1, %1 in 1 : vector<8x64xf32>, vector<8x64xf32> -> vector<8x128xf32>
    %3 = tpu.concatenate %2, %2 in 1 : vector<8x128xf32>, vector<8x128xf32> -> vector<8x256xf32>
    %4 = tpu.concatenate %3, %3 in 1 : vector<8x256xf32>, vector<8x256xf32> -> vector<8x512xf32>
    %c0_1 = arith.constant 0 : index
    %c0_2 = arith.constant 0 : index
    %5 = vector.load %arg3[%c0_1, %c0_2] : memref<1x512xf32, #tpu.memory_space<vmem>>, vector<1x512xf32>
    %6 = vector.broadcast %5 : vector<1x512xf32> to vector<8x512xf32>
    %7 = arith.addf %4, %6 : vector<8x512xf32>
    %c0_3 = arith.constant 0 : index
    %c0_4 = arith.constant 0 : index
    %8 = vector.load %arg4[%c0_3, %c0_4] : memref<8x512xf32, #tpu.memory_space<vmem>>, vector<8x512xf32>
    tpu.vector_store %arg4[%c0_3, %c0_4], %7 {strides = array<i32>} : memref<8x512xf32, #tpu.memory_space<vmem>>, vector<8x512xf32>,
    return
  }
  func.func @transform_0(%arg0: i32, %arg1: i32) -> (i32, i32) {
    %c0_i32 = arith.constant 0 : i32
    %c0_i32_0 = arith.constant 0 : i32
    return %arg0, %c0_i32 : i32, i32
  }
  func.func @transform_1(%arg0: i32, %arg1: i32) -> (i32, i32) {
    %c0_i32 = arith.constant 0 : i32
    %c0_i32_0 = arith.constant 0 : i32
    return %c0_i32, %arg1 : i32, i32
  }
  func.func @transform_2(%arg0: i32, %arg1: i32) -> (i32, i32) {
    %c0_i32 = arith.constant 0 : i32
    return %arg0, %arg1 : i32, i32
  }
}

module attributes {stable_mosaic.version = 11 : i64} {
  func.func @_pos_enc_pretiled_kernel(%arg0: i32, %arg1: i32, %arg2: memref<8x512xf32, #tpu.memory_space<vmem>>, %arg3: memref<1x512xf32, #tpu.memory_space<vmem>>, %arg4: memref<8x512xf32, #tpu.memory_space<vmem>>) attributes {dimension_semantics = [#tpu.dimension_semantics<parallel>, #tpu.dimension_semantics<parallel>], iteration_bounds = array<i64: 2, 1>, scalar_prefetch = 0 : i64, scratch_operands = 0 : i64, tpu.core_type = #tpu.core_type<tc>, window_params = [{transform_indices = @transform_0, window_bounds = array<i64: 8, 512>}, {transform_indices = @transform_1, window_bounds = array<i64: 1, 512>}, {transform_indices = @transform_2, window_bounds = array<i64: 8, 512>}]} {
    %c0 = arith.constant 0 : index
    %c0_0 = arith.constant 0 : index
    %0 = vector.load %arg2[%c0, %c0_0] : memref<8x512xf32, #tpu.memory_space<vmem>>, vector<8x512xf32>
    %c0_1 = arith.constant 0 : index
    %c0_2 = arith.constant 0 : index
    %1 = vector.load %arg3[%c0_1, %c0_2] : memref<1x512xf32, #tpu.memory_space<vmem>>, vector<1x512xf32>
    %2 = vector.broadcast %1 : vector<1x512xf32> to vector<8x512xf32>
    %3 = arith.addf %0, %2 : vector<8x512xf32>
    %c0_3 = arith.constant 0 : index
    %c0_4 = arith.constant 0 : index
    %4 = vector.load %arg4[%c0_3, %c0_4] : memref<8x512xf32, #tpu.memory_space<vmem>>, vector<8x512xf32>
    tpu.vector_store %arg4[%c0_3, %c0_4], %3 {strides = array<i32>} : memref<8x512xf32, #tpu.memory_space<vmem>>, vector<8x512xf32>,
    return
  }
  func.func @transform_0(%arg0: i32, %arg1: i32) -> (i32, i32) {
    %c0_i32 = arith.constant 0 : i32
    return %arg0, %arg1 : i32, i32
  }
  func.func @transform_1(%arg0: i32, %arg1: i32) -> (i32, i32) {
    %c0_i32 = arith.constant 0 : i32
    %c0_i32_0 = arith.constant 0 : i32
    return %c0_i32, %arg1 : i32, i32
  }
  func.func @transform_2(%arg0: i32, %arg1: i32) -> (i32, i32) {
    %c0_i32 = arith.constant 0 : i32
    return %arg0, %arg1 : i32, i32
  }
}

</mosaic_0001>

<llo_original>
// kernel: tpu_custom_call.1
$region0: #{tpu_custom_call.1}
  #allocation0 [shape = 'u32[]', space=smem, size = 0x4, offset = 0x4, fixed_abs, tag = 'smem constant byte address 0x4 - core index']
  #allocation1 [shape = 'u32[144,128]{1,0:T(1,128)}', space=vmem, size = 0x12000, scoped, tag = 'internal scratch']
  %s0 = inlined_call_operand.hbm [shape: f32[16,32], index: 0, kind: input, shape index: {}]
  %s1 = inlined_call_operand.hbm [shape: f32[1,512], index: 1, kind: input, shape index: {}]
  %s2 = inlined_call_operand.hbm [shape: f32[16,512], index: 2, kind: output, shape index: {}]
  %s3 = sld [smem:[#allocation0]]
  $region49: #{tpu_custom_call.1} parent=0
    _
  %s5 = ssub.s32 1, %s3
  %s6 = scalar_select 0, %s5, %s3
  $region1: #{tpu_custom_call.1} parent=0
    #allocation2 [shape = 'u8[8192]{0}', space=vmem, size = 0x2000, scoped, tag = 'input window, operand 0']
    #allocation3 [shape = 's32[2]{0}', space=sflag, size = 0x8, scoped, tag = 'scoped memory for tpu_custom_call.1']
    #allocation4 [shape = 's32[2]{0}', space=sflag, size = 0x8, scoped, tag = 'scoped memory for tpu_custom_call.1']
    #allocation5 [shape = 'u8[2048]{0}', space=vmem, size = 0x800, scoped, tag = 'input window, operand 1, single buffered']
    #allocation6 [shape = 's32[1]{0}', space=sflag, size = 0x4, scoped, tag = 'scoped memory for tpu_custom_call.1']
    #allocation7 [shape = 'u8[32768]{0}', space=vmem, size = 0x8000, scoped, tag = 'output window, operand 0']
    %7 = vsyncpa [#allocation3], 0
    %s8 = scalar_lea.sflag [#allocation3], 1
    %9 = vsyncpa %s8, 0
    %10 = vsyncpa [#allocation6], 0
    %11 = vsyncpa [#allocation4], 0
    %s12 = scalar_lea.sflag [#allocation4], 1
    %13 = vsyncpa %s12, 0
    loop: start=0, step=1, limit=4
    $region2: #{tpu_custom_call.1} parent=1 // loop_pre_header
      _
    $region3: #{tpu_custom_call.1} parent=1 // loop_header
      %s15 = sphi 0, %s19
      %p16 = scmp.ge.s32.totalorder %s15, 4
      %s22 = sphi 0, %s34
      %s23 = sphi 0, %s30
      %s24 = sphi 0, %s22
      %s25 = sphi 0, %s23
      %s26 = sphi 0, %s24
      %s27 = sphi 0, %s25
      %s37 = sphi 0, %s39
      %s40 = sphi 0, %s37
      %s41 = sphi 0, %s40
      %s57 = sphi 0, %s41
      %s63 = sphi 0, %s65
      %s66 = sphi 0, %s63
      %s67 = sphi 0, %s66
      %s83 = sphi 0, %s67
      %s91 = sphi 0, %s93
      %s94 = sphi 0, %s91
      %s95 = sphi 0, %s94
      %s111 = sphi 0, %s95
    $region4: #{tpu_custom_call.1} parent=1 // loop_header_branch
      %18 = sbr.rel (%p16) target = $region8
    $region5: #{tpu_custom_call.1} parent=1 // loop_body
      %s20 = ssub.s32 %s15, 1
      %s21 = ssub.s32 %s15, 2
      %s28 = sadd.s32 1, %s23
      %p29 = scmp.ge.s32.totalorder %s28, 1
      %s30 = scalar_select %p29, 0, %s28
      %s31 = sadd.s32 1, %s22
      %s32 = scalar_select %p29, %s31, %s22
      %p33 = scmp.ge.s32.totalorder %s32, 2
      %s34 = scalar_select %p33, 0, %s32
      %s35 = ssub.s32 %s22, %s34
      %p36 = scmp.eq.s32.totalorder %s35, 0
      %s38 = sadd.s32 %s37, 1
      %s39 = scalar_select %p36, %s37, %s38
      %p42 = pneg %p36
      %p43 = scmp.eq.s32.totalorder %s15, 1
      %p44 = por %p42, %p43
      %p45 = scmp.ne.s32.totalorder %s37, %s40
      %p46 = scmp.eq.s32.totalorder %s15, 0
      %p47 = por %p45, %p46
      %p48 = scmp.ne.s32.totalorder %s37, %s40
      %p49 = scmp.eq.s32.totalorder %s20, 1
      %p50 = por %p48, %p49
      %p51 = scmp.ne.s32.totalorder %s40, %s41
      %p52 = scmp.eq.s32.totalorder %s20, 0
      %p53 = por %p51, %p52
      %p54 = scmp.ne.s32.totalorder %s40, %s41
      %p55 = scmp.eq.s32.totalorder %s21, 1
      %p56 = por %p54, %p55
      %p58 = scmp.ne.s32.totalorder %s41, %s57
      %p59 = scmp.eq.s32.totalorder %s21, 0
      %p60 = por %p58, %p59
      %s61 = ssub.s32 %s23, %s30
      %p62 = scmp.eq.s32.totalorder %s61, 0
      %s64 = sadd.s32 %s63, 1
      %s65 = scalar_select %p62, %s63, %s64
      %p68 = pneg %p62
      %p69 = scmp.eq.s32.totalorder %s15, 1
      %p70 = por %p68, %p69
      %p71 = scmp.ne.s32.totalorder %s63, %s66
      %p72 = scmp.eq.s32.totalorder %s15, 0
      %p73 = por %p71, %p72
      %p74 = scmp.ne.s32.totalorder %s63, %s66
      %p75 = scmp.eq.s32.totalorder %s20, 1
      %p76 = por %p74, %p75
      %p77 = scmp.ne.s32.totalorder %s66, %s67
      %p78 = scmp.eq.s32.totalorder %s20, 0
      %p79 = por %p77, %p78
      %p80 = scmp.ne.s32.totalorder %s66, %s67
      %p81 = scmp.eq.s32.totalorder %s21, 1
      %p82 = por %p80, %p81
      %p84 = scmp.ne.s32.totalorder %s67, %s83
      %p85 = scmp.eq.s32.totalorder %s21, 0
      %p86 = por %p84, %p85
      %s87 = ssub.s32 %s22, %s34
      %s88 = ssub.s32 %s23, %s30
      %s89 = sor.u32 %s87, %s88
      %p90 = scmp.eq.s32.totalorder %s89, 0
      %s92 = sadd.s32 %s91, 1
      %s93 = scalar_select %p90, %s91, %s92
      %p96 = pneg %p90
      %p97 = scmp.eq.s32.totalorder %s15, 1
      %p98 = por %p96, %p97
      %p99 = scmp.ne.s32.totalorder %s91, %s94
      %p100 = scmp.eq.s32.totalorder %s15, 0
      %p101 = por %p99, %p100
      %p102 = scmp.ne.s32.totalorder %s91, %s94
      %p103 = scmp.eq.s32.totalorder %s20, 1
      %p104 = por %p102, %p103
      %p105 = scmp.ne.s32.totalorder %s94, %s95
      %p106 = scmp.eq.s32.totalorder %s20, 0
      %p107 = por %p105, %p106
      %p108 = scmp.ne.s32.totalorder %s94, %s95
      %p109 = scmp.eq.s32.totalorder %s21, 1
      %p110 = por %p108, %p109
      %p112 = scmp.ne.s32.totalorder %s95, %s111
      %p113 = scmp.eq.s32.totalorder %s21, 0
      %p114 = por %p112, %p113
      %p115 = scmp.le.s32.totalorder 1, %s15
      %p116 = scmp.lt.s32.totalorder %s15, 3
      %p117 = pnand %p115, %p116
      %p118 = pneg %p117
      // Predicated region
      $region9: #{tpu_custom_call.1} parent=5 // pred_check
        _
      $region10: #{tpu_custom_call.1} parent=5 // pred_check_branch
        %120 = sbr.rel (%p117) target = $region12
      $region11: #{tpu_custom_call.1} parent=5 // pred_region
        %s121 = ssub.s32 %s15, 1
        // Predicated region
        $region13: #{tpu_custom_call.1} parent=11 // pred_check
          %p122 = pneg %p79
        $region14: #{tpu_custom_call.1} parent=11 // pred_check_branch
          %124 = sbr.rel (%p122) target = $region16
        $region15: #{tpu_custom_call.1} parent=11 // pred_region
          %s125 = smul.u32 4, %s25
          %s127 = ssub.s32 64, 64
          %128 = vsyncadd [#allocation6], %s127
          %s129 = smul.addr %s125, 16
          %s130 = scalar_lea.hbm %s1, %s129
          %s132 = sshll.u32 [#allocation5], 4
          %s133 = int_to_ptr.vmem [resolvable:$true] %s132
          %135 = dma.hbm_to_vmem [thread:$0]  %s130, 64, %s133, [#allocation6]
        $region16: #{tpu_custom_call.1} parent=11 // pred_fallthru
          _
      $region12: #{tpu_custom_call.1} parent=5 // pred_fallthru
        _
      %p136 = scmp.lt.s32.totalorder %s15, 2
      // Predicated region
      $region17: #{tpu_custom_call.1} parent=5 // pred_check
        %p137 = pneg %p136
      $region18: #{tpu_custom_call.1} parent=5 // pred_check_branch
        %139 = sbr.rel (%p137) target = $region20
      $region19: #{tpu_custom_call.1} parent=5 // pred_region
        // Predicated region
        $region21: #{tpu_custom_call.1} parent=19 // pred_check
          %p140 = pneg %p47
        $region22: #{tpu_custom_call.1} parent=19 // pred_check_branch
          %142 = sbr.rel (%p140) target = $region24
        $region23: #{tpu_custom_call.1} parent=19 // pred_region
          %s143 = sand.u32 %s37, 1
          %s144 = scalar_lea.sflag [#allocation3], %s143
          %s145 = sand.u32 %s37, 1
          %s146 = smul.addr %s145, 8
          %s147 = scalar_lea.vmem [#allocation2], %s146
          %s149 = ssub.s32 128, 128
          %150 = vsyncadd %s144, %s149
          %s151 = smul.addr %s22, 128
          %s152 = scalar_lea.hbm %s0, %s151
          %s154 = sshll.u32 %s147, 4
          %s155 = int_to_ptr.vmem [resolvable:$true] %s154
          %157 = dma.hbm_to_vmem [thread:$0]  %s152, 128, %s155, %s144
        $region24: #{tpu_custom_call.1} parent=19 // pred_fallthru
          _
      $region20: #{tpu_custom_call.1} parent=5 // pred_fallthru
        _
      %p158 = scmp.le.s32.totalorder 1, %s15
      %p159 = scmp.lt.s32.totalorder %s15, 3
      %p160 = pnand %p158, %p159
      %p161 = pneg %p160
      // Predicated region
      $region25: #{tpu_custom_call.1} parent=5 // pred_check
        _
      $region26: #{tpu_custom_call.1} parent=5 // pred_check_branch
        %163 = sbr.rel (%p160) target = $region28
      $region27: #{tpu_custom_call.1} parent=5 // pred_region
        %s164 = ssub.s32 %s15, 1
        %s165 = sand.u32 %s40, 1
        %s166 = scalar_lea.sflag [#allocation3], %s165
        %s167 = sand.u32 %s40, 1
        %s168 = smul.addr %s167, 8
        %s169 = scalar_lea.vmem [#allocation2], %s168
        // Predicated region
        $region29: #{tpu_custom_call.1} parent=27 // pred_check
          %p170 = pneg %p53
        $region30: #{tpu_custom_call.1} parent=27 // pred_check_branch
          %172 = sbr.rel (%p170) target = $region32
        $region31: #{tpu_custom_call.1} parent=27 // pred_region
          %173 = dma.done %s166, 128
        $region32: #{tpu_custom_call.1} parent=27 // pred_fallthru
          _
        // Predicated region
        $region33: #{tpu_custom_call.1} parent=27 // pred_check
          %p174 = pneg %p79
        $region34: #{tpu_custom_call.1} parent=27 // pred_check_branch
          %176 = sbr.rel (%p174) target = $region36
        $region35: #{tpu_custom_call.1} parent=27 // pred_region
          %177 = dma.done [#allocation6], 64
        $region36: #{tpu_custom_call.1} parent=27 // pred_fallthru
          _
        %s178 = sand.u32 %s40, 1
        %s179 = scalar_lea.sflag [#allocation3], %s178
        %s180 = sand.u32 %s40, 1
        %s181 = smul.addr %s180, 8
        %s182 = scalar_lea.vmem [#allocation2], %s181
        %p183 = pneg %p53
        %p184 = pneg %p50
        %p185 = pneg %p79
        %p186 = pneg %p76
        %p187 = pneg %p107
        %p188 = pneg %p104
        %s189 = sand.u32 %s94, 1
        %s190 = scalar_lea.sflag [#allocation4], %s189
        %s191 = sand.u32 %s94, 1
        %s192 = smul.addr %s191, 32
        %s193 = scalar_lea.vmem [#allocation7], %s192
        %s194 = smul.u32 4, %s25
        %s195 = smul.u32 4, %s25
        %v196 = vld [vmem:[%s169] sm:$0xff]
        %198 = vrot.lane.b32.xlu0 %v196, 32
        %v199 = vpop.permute.xlu0 %198
        %vm201 = vcmask 261120
        %v202 = vsel %vm201, %v196, %v199
        %204 = vrot.lane.b32.xlu0 %v202, 64
        %v205 = vpop.permute.xlu0 %204
        %vm207 = vcmask 523264
        %v208 = vsel %vm207, %v202, %v205
        %v209 = vld [vmem:[#allocation5] sm:$0xf]
        %v211 = vlaneseq
        %v212 = vshrl.u32 %v211, 7
        %v213 = vsub.s32 0, %v212
        %v214 = vrot.slane %v209, %v213
        %v215 = vlaneseq
        %v216 = vshrl.u32 %v215, 7
        %v217 = vsub.s32 1, %v216
        %v218 = vrot.slane %v209, %v217
        %v219 = vlaneseq
        %v220 = vshrl.u32 %v219, 7
        %v221 = vsub.s32 2, %v220
        %v222 = vrot.slane %v209, %v221
        %v223 = vlaneseq
        %v224 = vshrl.u32 %v223, 7
        %v225 = vsub.s32 3, %v224
        %v226 = vrot.slane %v209, %v225
        %v231 = vadd.f32 %v208, %v214
        %v232 = vadd.f32 %v208, %v218
        %v233 = vadd.f32 %v208, %v222
        %v234 = vadd.f32 %v208, %v226
        %235 = vst [vmem:[%s193] sm:$0xff] %v231
        %236 = vst [vmem:[%s193 + $0x8] sm:$0xff] %v232
        %237 = vst [vmem:[%s193 + $0x10] sm:$0xff] %v233
        %238 = vst [vmem:[%s193 + $0x18] sm:$0xff] %v234
        %s239 = sand.u32 %s94, 1
        %s240 = scalar_lea.sflag [#allocation4], %s239
        %s241 = sand.u32 %s94, 1
        %s242 = smul.addr %s241, 32
        %s243 = scalar_lea.vmem [#allocation7], %s242
        // Predicated region
        $region37: #{tpu_custom_call.1} parent=27 // pred_check
          %p244 = pneg %p104
        $region38: #{tpu_custom_call.1} parent=27 // pred_check_branch
          %246 = sbr.rel (%p244) target = $region40
        $region39: #{tpu_custom_call.1} parent=27 // pred_region
          %s247 = smul.u32 4, %s25
          %s249 = ssub.s32 512, 512
          %250 = vsyncadd %s240, %s249
          %s251 = smul.addr %s24, 4
          %s252 = sadd.s32 %s247, %s251
          %s253 = smul.addr %s252, 128
          %s254 = scalar_lea.hbm %s2, %s253
          %s256 = sshll.u32 %s243, 4
          %s257 = int_to_ptr.vmem [resolvable:$true] %s256
          %259 = dma.vmem_to_hbm [thread:$0]  %s257, 512, %s254, %s240
        $region40: #{tpu_custom_call.1} parent=27 // pred_fallthru
          _
      $region28: #{tpu_custom_call.1} parent=5 // pred_fallthru
        _
      %p260 = scmp.le.s32.totalorder 2, %s15
      // Predicated region
      $region41: #{tpu_custom_call.1} parent=5 // pred_check
        %p261 = pneg %p260
      $region42: #{tpu_custom_call.1} parent=5 // pred_check_branch
        %263 = sbr.rel (%p261) target = $region44
      $region43: #{tpu_custom_call.1} parent=5 // pred_region
        %s264 = ssub.s32 %s15, 2
        // Predicated region
        $region45: #{tpu_custom_call.1} parent=43 // pred_check
          %p265 = pneg %p110
        $region46: #{tpu_custom_call.1} parent=43 // pred_check_branch
          %267 = sbr.rel (%p265) target = $region48
        $region47: #{tpu_custom_call.1} parent=43 // pred_region
          %s268 = sand.u32 %s95, 1
          %s269 = scalar_lea.sflag [#allocation4], %s268
          %s270 = sand.u32 %s95, 1
          %s271 = smul.addr %s270, 32
          %s272 = scalar_lea.vmem [#allocation7], %s271
          %273 = dma.done %s269, 512
        $region48: #{tpu_custom_call.1} parent=43 // pred_fallthru
          _
      $region44: #{tpu_custom_call.1} parent=5 // pred_fallthru
        _
    $region6: #{tpu_custom_call.1} parent=1 // loop_footer
      %s19 = sadd.s32 1, %s15
    $region7: #{tpu_custom_call.1} parent=1 // loop_footer_branch
      %14 = sbr.rel target = $region3
    $region8: #{tpu_custom_call.1} parent=1 // loop_exit
      _
    %274 = vsyncpa [#allocation3], 1
    %s275 = scalar_lea.sflag [#allocation3], 1
    %276 = vsyncpa %s275, 1
    %277 = vsyncpa [#allocation6], 1
    %278 = vsyncpa [#allocation4], 1
    %s279 = scalar_lea.sflag [#allocation4], 1
    %280 = vsyncpa %s279, 1

// kernel: tpu_custom_call.1
$region0: #{tpu_custom_call.1}
  #allocation0 [shape = 'u32[]', space=smem, size = 0x4, offset = 0x4, fixed_abs, tag = 'smem constant byte address 0x4 - core index']
  #allocation1 [shape = 'u32[144,128]{1,0:T(1,128)}', space=vmem, size = 0x12000, scoped, tag = 'internal scratch']
  %s0 = inlined_call_operand.hbm [shape: f32[16,512], index: 0, kind: input, shape index: {}]
  %s1 = inlined_call_operand.hbm [shape: f32[1,512], index: 1, kind: input, shape index: {}]
  %s2 = inlined_call_operand.hbm [shape: f32[16,512], index: 2, kind: output, shape index: {}]
  %s3 = sld [smem:[#allocation0]]
  $region49: #{tpu_custom_call.1} parent=0
    _
  %s5 = ssub.s32 1, %s3
  %s6 = scalar_select 0, %s5, %s3
  $region1: #{tpu_custom_call.1} parent=0
    #allocation2 [shape = 'u8[32768]{0}', space=vmem, size = 0x8000, scoped, tag = 'input window, operand 0']
    #allocation3 [shape = 's32[2]{0}', space=sflag, size = 0x8, scoped, tag = 'scoped memory for tpu_custom_call.1']
    #allocation4 [shape = 's32[2]{0}', space=sflag, size = 0x8, scoped, tag = 'scoped memory for tpu_custom_call.1']
    #allocation5 [shape = 'u8[2048]{0}', space=vmem, size = 0x800, scoped, tag = 'input window, operand 1, single buffered']
    #allocation6 [shape = 's32[1]{0}', space=sflag, size = 0x4, scoped, tag = 'scoped memory for tpu_custom_call.1']
    #allocation7 [shape = 'u8[32768]{0}', space=vmem, size = 0x8000, scoped, tag = 'output window, operand 0']
    %7 = vsyncpa [#allocation3], 0
    %s8 = scalar_lea.sflag [#allocation3], 1
    %9 = vsyncpa %s8, 0
    %10 = vsyncpa [#allocation6], 0
    %11 = vsyncpa [#allocation4], 0
    %s12 = scalar_lea.sflag [#allocation4], 1
    %13 = vsyncpa %s12, 0
    loop: start=0, step=1, limit=4
    $region2: #{tpu_custom_call.1} parent=1 // loop_pre_header
      _
    $region3: #{tpu_custom_call.1} parent=1 // loop_header
      %s15 = sphi 0, %s19
      %p16 = scmp.ge.s32.totalorder %s15, 4
      %s22 = sphi 0, %s34
      %s23 = sphi 0, %s30
      %s24 = sphi 0, %s22
      %s25 = sphi 0, %s23
      %s26 = sphi 0, %s24
      %s27 = sphi 0, %s25
      %s39 = sphi 0, %s41
      %s42 = sphi 0, %s39
      %s43 = sphi 0, %s42
      %s59 = sphi 0, %s43
      %s65 = sphi 0, %s67
      %s68 = sphi 0, %s65
      %s69 = sphi 0, %s68
      %s85 = sphi 0, %s69
      %s93 = sphi 0, %s95
      %s96 = sphi 0, %s93
      %s97 = sphi 0, %s96
      %s113 = sphi 0, %s97
    $region4: #{tpu_custom_call.1} parent=1 // loop_header_branch
      %18 = sbr.rel (%p16) target = $region8
    $region5: #{tpu_custom_call.1} parent=1 // loop_body
      %s20 = ssub.s32 %s15, 1
      %s21 = ssub.s32 %s15, 2
      %s28 = sadd.s32 1, %s23
      %p29 = scmp.ge.s32.totalorder %s28, 1
      %s30 = scalar_select %p29, 0, %s28
      %s31 = sadd.s32 1, %s22
      %s32 = scalar_select %p29, %s31, %s22
      %p33 = scmp.ge.s32.totalorder %s32, 2
      %s34 = scalar_select %p33, 0, %s32
      %s35 = ssub.s32 %s22, %s34
      %s36 = ssub.s32 %s23, %s30
      %s37 = sor.u32 %s35, %s36
      %p38 = scmp.eq.s32.totalorder %s37, 0
      %s40 = sadd.s32 %s39, 1
      %s41 = scalar_select %p38, %s39, %s40
      %p44 = pneg %p38
      %p45 = scmp.eq.s32.totalorder %s15, 1
      %p46 = por %p44, %p45
      %p47 = scmp.ne.s32.totalorder %s39, %s42
      %p48 = scmp.eq.s32.totalorder %s15, 0
      %p49 = por %p47, %p48
      %p50 = scmp.ne.s32.totalorder %s39, %s42
      %p51 = scmp.eq.s32.totalorder %s20, 1
      %p52 = por %p50, %p51
      %p53 = scmp.ne.s32.totalorder %s42, %s43
      %p54 = scmp.eq.s32.totalorder %s20, 0
      %p55 = por %p53, %p54
      %p56 = scmp.ne.s32.totalorder %s42, %s43
      %p57 = scmp.eq.s32.totalorder %s21, 1
      %p58 = por %p56, %p57
      %p60 = scmp.ne.s32.totalorder %s43, %s59
      %p61 = scmp.eq.s32.totalorder %s21, 0
      %p62 = por %p60, %p61
      %s63 = ssub.s32 %s23, %s30
      %p64 = scmp.eq.s32.totalorder %s63, 0
      %s66 = sadd.s32 %s65, 1
      %s67 = scalar_select %p64, %s65, %s66
      %p70 = pneg %p64
      %p71 = scmp.eq.s32.totalorder %s15, 1
      %p72 = por %p70, %p71
      %p73 = scmp.ne.s32.totalorder %s65, %s68
      %p74 = scmp.eq.s32.totalorder %s15, 0
      %p75 = por %p73, %p74
      %p76 = scmp.ne.s32.totalorder %s65, %s68
      %p77 = scmp.eq.s32.totalorder %s20, 1
      %p78 = por %p76, %p77
      %p79 = scmp.ne.s32.totalorder %s68, %s69
      %p80 = scmp.eq.s32.totalorder %s20, 0
      %p81 = por %p79, %p80
      %p82 = scmp.ne.s32.totalorder %s68, %s69
      %p83 = scmp.eq.s32.totalorder %s21, 1
      %p84 = por %p82, %p83
      %p86 = scmp.ne.s32.totalorder %s69, %s85
      %p87 = scmp.eq.s32.totalorder %s21, 0
      %p88 = por %p86, %p87
      %s89 = ssub.s32 %s22, %s34
      %s90 = ssub.s32 %s23, %s30
      %s91 = sor.u32 %s89, %s90
      %p92 = scmp.eq.s32.totalorder %s91, 0
      %s94 = sadd.s32 %s93, 1
      %s95 = scalar_select %p92, %s93, %s94
      %p98 = pneg %p92
      %p99 = scmp.eq.s32.totalorder %s15, 1
      %p100 = por %p98, %p99
      %p101 = scmp.ne.s32.totalorder %s93, %s96
      %p102 = scmp.eq.s32.totalorder %s15, 0
      %p103 = por %p101, %p102
      %p104 = scmp.ne.s32.totalorder %s93, %s96
      %p105 = scmp.eq.s32.totalorder %s20, 1
      %p106 = por %p104, %p105
      %p107 = scmp.ne.s32.totalorder %s96, %s97
      %p108 = scmp.eq.s32.totalorder %s20, 0
      %p109 = por %p107, %p108
      %p110 = scmp.ne.s32.totalorder %s96, %s97
      %p111 = scmp.eq.s32.totalorder %s21, 1
      %p112 = por %p110, %p111
      %p114 = scmp.ne.s32.totalorder %s97, %s113
      %p115 = scmp.eq.s32.totalorder %s21, 0
      %p116 = por %p114, %p115
      %p117 = scmp.le.s32.totalorder 1, %s15
      %p118 = scmp.lt.s32.totalorder %s15, 3
      %p119 = pnand %p117, %p118
      %p120 = pneg %p119
      // Predicated region
      $region9: #{tpu_custom_call.1} parent=5 // pred_check
        _
      $region10: #{tpu_custom_call.1} parent=5 // pred_check_branch
        %122 = sbr.rel (%p119) target = $region12
      $region11: #{tpu_custom_call.1} parent=5 // pred_region
        %s123 = ssub.s32 %s15, 1
        // Predicated region
        $region13: #{tpu_custom_call.1} parent=11 // pred_check
          %p124 = pneg %p81
        $region14: #{tpu_custom_call.1} parent=11 // pred_check_branch
          %126 = sbr.rel (%p124) target = $region16
        $region15: #{tpu_custom_call.1} parent=11 // pred_region
          %s127 = smul.u32 4, %s25
          %s129 = ssub.s32 64, 64
          %130 = vsyncadd [#allocation6], %s129
          %s131 = smul.addr %s127, 16
          %s132 = scalar_lea.hbm %s1, %s131
          %s134 = sshll.u32 [#allocation5], 4
          %s135 = int_to_ptr.vmem [resolvable:$true] %s134
          %137 = dma.hbm_to_vmem [thread:$0]  %s132, 64, %s135, [#allocation6]
        $region16: #{tpu_custom_call.1} parent=11 // pred_fallthru
          _
      $region12: #{tpu_custom_call.1} parent=5 // pred_fallthru
        _
      %p138 = scmp.lt.s32.totalorder %s15, 2
      // Predicated region
      $region17: #{tpu_custom_call.1} parent=5 // pred_check
        %p139 = pneg %p138
      $region18: #{tpu_custom_call.1} parent=5 // pred_check_branch
        %141 = sbr.rel (%p139) target = $region20
      $region19: #{tpu_custom_call.1} parent=5 // pred_region
        // Predicated region
        $region21: #{tpu_custom_call.1} parent=19 // pred_check
          %p142 = pneg %p49
        $region22: #{tpu_custom_call.1} parent=19 // pred_check_branch
          %144 = sbr.rel (%p142) target = $region24
        $region23: #{tpu_custom_call.1} parent=19 // pred_region
          %s145 = sand.u32 %s39, 1
          %s146 = scalar_lea.sflag [#allocation3], %s145
          %s147 = sand.u32 %s39, 1
          %s148 = smul.addr %s147, 32
          %s149 = scalar_lea.vmem [#allocation2], %s148
          %s150 = smul.u32 4, %s23
          %s152 = ssub.s32 512, 512
          %153 = vsyncadd %s146, %s152
          %s154 = smul.addr %s22, 4
          %s155 = sadd.s32 %s150, %s154
          %s156 = smul.addr %s155, 128
          %s157 = scalar_lea.hbm %s0, %s156
          %s159 = sshll.u32 %s149, 4
          %s160 = int_to_ptr.vmem [resolvable:$true] %s159
          %162 = dma.hbm_to_vmem [thread:$0]  %s157, 512, %s160, %s146
        $region24: #{tpu_custom_call.1} parent=19 // pred_fallthru
          _
      $region20: #{tpu_custom_call.1} parent=5 // pred_fallthru
        _
      %p163 = scmp.le.s32.totalorder 1, %s15
      %p164 = scmp.lt.s32.totalorder %s15, 3
      %p165 = pnand %p163, %p164
      %p166 = pneg %p165
      // Predicated region
      $region25: #{tpu_custom_call.1} parent=5 // pred_check
        _
      $region26: #{tpu_custom_call.1} parent=5 // pred_check_branch
        %168 = sbr.rel (%p165) target = $region28
      $region27: #{tpu_custom_call.1} parent=5 // pred_region
        %s169 = ssub.s32 %s15, 1
        %s170 = sand.u32 %s42, 1
        %s171 = scalar_lea.sflag [#allocation3], %s170
        %s172 = sand.u32 %s42, 1
        %s173 = smul.addr %s172, 32
        %s174 = scalar_lea.vmem [#allocation2], %s173
        // Predicated region
        $region29: #{tpu_custom_call.1} parent=27 // pred_check
          %p175 = pneg %p55
        $region30: #{tpu_custom_call.1} parent=27 // pred_check_branch
          %177 = sbr.rel (%p175) target = $region32
        $region31: #{tpu_custom_call.1} parent=27 // pred_region
          %178 = dma.done %s171, 512
        $region32: #{tpu_custom_call.1} parent=27 // pred_fallthru
          _
        // Predicated region
        $region33: #{tpu_custom_call.1} parent=27 // pred_check
          %p179 = pneg %p81
        $region34: #{tpu_custom_call.1} parent=27 // pred_check_branch
          %181 = sbr.rel (%p179) target = $region36
        $region35: #{tpu_custom_call.1} parent=27 // pred_region
          %182 = dma.done [#allocation6], 64
        $region36: #{tpu_custom_call.1} parent=27 // pred_fallthru
          _
        %s183 = sand.u32 %s42, 1
        %s184 = scalar_lea.sflag [#allocation3], %s183
        %s185 = sand.u32 %s42, 1
        %s186 = smul.addr %s185, 32
        %s187 = scalar_lea.vmem [#allocation2], %s186
        %p188 = pneg %p55
        %p189 = pneg %p52
        %p190 = pneg %p81
        %p191 = pneg %p78
        %p192 = pneg %p109
        %p193 = pneg %p106
        %s194 = sand.u32 %s96, 1
        %s195 = scalar_lea.sflag [#allocation4], %s194
        %s196 = sand.u32 %s96, 1
        %s197 = smul.addr %s196, 32
        %s198 = scalar_lea.vmem [#allocation7], %s197
        %s199 = smul.u32 4, %s25
        %s200 = smul.u32 4, %s25
        %s201 = smul.u32 4, %s25
        %v202 = vld [vmem:[%s174] sm:$0xff]
        %v203 = vld [vmem:[%s174 + $0x8] sm:$0xff]
        %v204 = vld [vmem:[%s174 + $0x10] sm:$0xff]
        %v205 = vld [vmem:[%s174 + $0x18] sm:$0xff]
        %v206 = vld [vmem:[#allocation5] sm:$0xf]
        %v208 = vlaneseq
        %v209 = vshrl.u32 %v208, 7
        %v210 = vsub.s32 0, %v209
        %v211 = vrot.slane %v206, %v210
        %v212 = vlaneseq
        %v213 = vshrl.u32 %v212, 7
        %v214 = vsub.s32 1, %v213
        %v215 = vrot.slane %v206, %v214
        %v216 = vlaneseq
        %v217 = vshrl.u32 %v216, 7
        %v218 = vsub.s32 2, %v217
        %v219 = vrot.slane %v206, %v218
        %v220 = vlaneseq
        %v221 = vshrl.u32 %v220, 7
        %v222 = vsub.s32 3, %v221
        %v223 = vrot.slane %v206, %v222
        %v228 = vadd.f32 %v202, %v211
        %v229 = vadd.f32 %v203, %v215
        %v230 = vadd.f32 %v204, %v219
        %v231 = vadd.f32 %v205, %v223
        %232 = vst [vmem:[%s198] sm:$0xff] %v228
        %233 = vst [vmem:[%s198 + $0x8] sm:$0xff] %v229
        %234 = vst [vmem:[%s198 + $0x10] sm:$0xff] %v230
        %235 = vst [vmem:[%s198 + $0x18] sm:$0xff] %v231
        %s236 = sand.u32 %s96, 1
        %s237 = scalar_lea.sflag [#allocation4], %s236
        %s238 = sand.u32 %s96, 1
        %s239 = smul.addr %s238, 32
        %s240 = scalar_lea.vmem [#allocation7], %s239
        // Predicated region
        $region37: #{tpu_custom_call.1} parent=27 // pred_check
          %p241 = pneg %p106
        $region38: #{tpu_custom_call.1} parent=27 // pred_check_branch
          %243 = sbr.rel (%p241) target = $region40
        $region39: #{tpu_custom_call.1} parent=27 // pred_region
          %s244 = smul.u32 4, %s25
          %s246 = ssub.s32 512, 512
          %247 = vsyncadd %s237, %s246
          %s248 = smul.addr %s24, 4
          %s249 = sadd.s32 %s244, %s248
          %s250 = smul.addr %s249, 128
          %s251 = scalar_lea.hbm %s2, %s250
          %s253 = sshll.u32 %s240, 4
          %s254 = int_to_ptr.vmem [resolvable:$true] %s253
          %256 = dma.vmem_to_hbm [thread:$0]  %s254, 512, %s251, %s237
        $region40: #{tpu_custom_call.1} parent=27 // pred_fallthru
          _
      $region28: #{tpu_custom_call.1} parent=5 // pred_fallthru
        _
      %p257 = scmp.le.s32.totalorder 2, %s15
      // Predicated region
      $region41: #{tpu_custom_call.1} parent=5 // pred_check
        %p258 = pneg %p257
      $region42: #{tpu_custom_call.1} parent=5 // pred_check_branch
        %260 = sbr.rel (%p258) target = $region44
      $region43: #{tpu_custom_call.1} parent=5 // pred_region
        %s261 = ssub.s32 %s15, 2
        // Predicated region
        $region45: #{tpu_custom_call.1} parent=43 // pred_check
          %p262 = pneg %p112
        $region46: #{tpu_custom_call.1} parent=43 // pred_check_branch
          %264 = sbr.rel (%p262) target = $region48
        $region47: #{tpu_custom_call.1} parent=43 // pred_region
          %s265 = sand.u32 %s97, 1
          %s266 = scalar_lea.sflag [#allocation4], %s265
          %s267 = sand.u32 %s97, 1
          %s268 = smul.addr %s267, 32
          %s269 = scalar_lea.vmem [#allocation7], %s268
          %270 = dma.done %s266, 512
        $region48: #{tpu_custom_call.1} parent=43 // pred_fallthru
          _
      $region44: #{tpu_custom_call.1} parent=5 // pred_fallthru
        _
    $region6: #{tpu_custom_call.1} parent=1 // loop_footer
      %s19 = sadd.s32 1, %s15
    $region7: #{tpu_custom_call.1} parent=1 // loop_footer_branch
      %14 = sbr.rel target = $region3
    $region8: #{tpu_custom_call.1} parent=1 // loop_exit
      _
    %271 = vsyncpa [#allocation3], 1
    %s272 = scalar_lea.sflag [#allocation3], 1
    %273 = vsyncpa %s272, 1
    %274 = vsyncpa [#allocation6], 1
    %275 = vsyncpa [#allocation4], 1
    %s276 = scalar_lea.sflag [#allocation4], 1
    %277 = vsyncpa %s276, 1

</llo_original>
